<compile_context>
chip_gen: v7x
topology: tpu7x:2x2x1
jax: 0.10.0
libtpu: 0.0.40
codegen_flags: <defaults>
</compile_context>

<pallas_src>
import functools

import jax
import jax.numpy as jnp
from jax.experimental import pallas as pl
from jax.experimental.pallas import tpu as pltpu

LANE = 128
VMEM_LIMIT = 48 * 1024 * 1024  # conservative on v7x (64 MiB physical)


def _round_up(x, m):
    return ((x + m - 1) // m) * m


# ------------------------------ kernels ------------------------------

def transform_kernel(high_ref, low_ref, w_emb_ref, b_emb_ref,
                     w1_hi_ref, w1_lo_ref, xw1_ref):
    """XW1 = high @ W1_hi + ReLU(low @ W_emb + b_emb) @ W1_lo  (per node-row tile)."""
    emb = jnp.dot(low_ref[...], w_emb_ref[...],
                  preferred_element_type=jnp.float32)
    emb = jnp.maximum(emb + b_emb_ref[...], 0.0)
    xw1 = jnp.dot(high_ref[...], w1_hi_ref[...],
                  preferred_element_type=jnp.float32)
    xw1 += jnp.dot(emb.astype(w1_lo_ref.dtype), w1_lo_ref[...],
                   preferred_element_type=jnp.float32)
    xw1_ref[...] = xw1.astype(xw1_ref.dtype)


def propagate_transform_kernel(adj_ref, x_ref, b_prop_ref, w_next_ref,
                               out_ref, acc_ref):
    """out[i] = ReLU( sum_k A_hat[i,k] @ X[k] + b_prop ) @ W_next."""
    k = pl.program_id(1)

    @pl.when(k == 0)
    def _():
        acc_ref[...] = jnp.zeros_like(acc_ref)

    acc_ref[...] += jnp.dot(adj_ref[...], x_ref[...],
                            preferred_element_type=jnp.float32)

    @pl.when(k == pl.num_programs(1) - 1)
    def _():
        h = jnp.maximum(acc_ref[...] + b_prop_ref[...], 0.0)
        # dropout (eval mode) = identity
        out_ref[...] = jnp.dot(h.astype(w_next_ref.dtype), w_next_ref[...],
                               preferred_element_type=jnp.float32
                               ).astype(out_ref.dtype)


def propagate_head_kernel(adj_ref, x_ref, b_prop_ref, w_lin_ref, b_lin_ref,
                          out_ref, acc_ref, *, out_dim):
    """out[i] = log_softmax( ReLU( sum_k A_hat[i,k] @ X[k] + b_prop ) @ W_lin + b_lin )."""
    k = pl.program_id(1)

    @pl.when(k == 0)
    def _():
        acc_ref[...] = jnp.zeros_like(acc_ref)

    acc_ref[...] += jnp.dot(adj_ref[...], x_ref[...],
                            preferred_element_type=jnp.float32)

    @pl.when(k == pl.num_programs(1) - 1)
    def _():
        h = jnp.maximum(acc_ref[...] + b_prop_ref[...], 0.0)
        # dropout (eval mode) = identity
        logits = jnp.dot(h.astype(w_lin_ref.dtype), w_lin_ref[...],
                         preferred_element_type=jnp.float32) + b_lin_ref[...]
        # mask lane-padding columns so they do not pollute the softmax
        col = jax.lax.broadcasted_iota(jnp.int32, logits.shape, 1)
        logits = jnp.where(col < out_dim, logits, -1e30)
        m = jnp.max(logits, axis=1, keepdims=True)
        shifted = logits - m
        lse = jnp.log(jnp.sum(jnp.exp(shifted), axis=1, keepdims=True))
        out_ref[...] = (shifted - lse).astype(out_ref.dtype)


# -------------------------- glue / wrapper ---------------------------

def build_normalized_adjacency(edge_index, num_nodes):
    """Dense GCN propagation matrix D^-1/2 (A + I) D^-1/2 from edge_index (2, E)."""
    src = edge_index[0]
    dst = edge_index[1]
    loops = jnp.arange(num_nodes, dtype=edge_index.dtype)
    src = jnp.concatenate([src, loops])
    dst = jnp.concatenate([dst, loops])
    deg = jnp.zeros((num_nodes,), jnp.float32).at[dst].add(1.0)
    dinv = jnp.where(deg > 0, 1.0 / jnp.sqrt(deg), 0.0)
    vals = dinv[src] * dinv[dst]
    adj = jnp.zeros((num_nodes, num_nodes), jnp.float32).at[dst, src].add(vals)
    return adj


def _pad2(x, rows, cols):
    return jnp.pad(x, ((0, rows - x.shape[0]), (0, cols - x.shape[1])))


def combined_gcn_forward(high, low, edge_index, params, *, tile_n=256,
                         compute_dtype=jnp.bfloat16):
    N, high_dim = high.shape
    low_dim = low.shape[1]
    emb_dim = params["w_emb"].shape[1]
    hidden = params["w2"].shape[1]
    out_dim = params["w_lin"].shape[1]

    # lane-dense padded sizes
    n_p = _round_up(N, tile_n)
    dh_p = _round_up(high_dim, LANE)
    dl_p = _round_up(low_dim, LANE)
    de_p = _round_up(emb_dim, LANE)
    h_p = _round_up(hidden, LANE)
    o_p = _round_up(out_dim, LANE)

    tm = tk = tile_n
    ni, nk = n_p // tm, n_p // tk

    # dense normalized adjacency, zero-padded, bf16
    adj = build_normalized_adjacency(edge_index, N)
    adj = _pad2(adj, n_p, n_p).astype(compute_dtype)

    high_p = _pad2(high.astype(jnp.float32), n_p, dh_p).astype(compute_dtype)
    low_p = _pad2(low.astype(jnp.float32), n_p, dl_p).astype(compute_dtype)

    # split conv1 weight row-wise so no lane-axis concat is needed in-kernel
    w1 = params["w1"]
    w_emb = _pad2(params["w_emb"], dl_p, de_p).astype(compute_dtype)
    b_emb = _pad2(params["b_emb"].reshape(1, -1), 1, de_p).astype(jnp.float32)
    w1_hi = _pad2(w1[:high_dim, :], dh_p, h_p).astype(compute_dtype)
    w1_lo = _pad2(w1[high_dim:, :], de_p, h_p).astype(compute_dtype)
    b1 = _pad2(params["b1"].reshape(1, -1), 1, h_p).astype(jnp.float32)
    w2 = _pad2(params["w2"], h_p, h_p).astype(compute_dtype)
    b2 = _pad2(params["b2"].reshape(1, -1), 1, h_p).astype(jnp.float32)
    w_lin = _pad2(params["w_lin"], h_p, o_p).astype(compute_dtype)
    b_lin = _pad2(params["b_lin"].reshape(1, -1), 1, o_p).astype(jnp.float32)

    # ---------------- kernel 1: per-node feature transform -> XW1 ----------------
    xw1 = pl.pallas_call(
        transform_kernel,
        out_shape=jax.ShapeDtypeStruct((n_p, h_p), compute_dtype),
        grid=(ni,),
        in_specs=[
            pl.BlockSpec((tm, dh_p), lambda i: (i, 0)),      # high
            pl.BlockSpec((tm, dl_p), lambda i: (i, 0)),      # low
            pl.BlockSpec((dl_p, de_p), lambda i: (0, 0)),    # W_emb
            pl.BlockSpec((1, de_p), lambda i: (0, 0)),       # b_emb
            pl.BlockSpec((dh_p, h_p), lambda i: (0, 0)),     # W1_hi
            pl.BlockSpec((de_p, h_p), lambda i: (0, 0)),     # W1_lo
        ],
        out_specs=pl.BlockSpec((tm, h_p), lambda i: (i, 0)),
        compiler_params=pltpu.CompilerParams(
            dimension_semantics=("parallel",),
            vmem_limit_bytes=VMEM_LIMIT),
        cost_estimate=pl.CostEstimate(
            flops=2 * n_p * (dl_p * de_p + dh_p * h_p + de_p * h_p),
            transcendentals=0,
            bytes_accessed=2 * n_p * (dh_p + dl_p + h_p)),
    )(high_p, low_p, w_emb, b_emb, w1_hi, w1_lo)

    # ---------------- kernel 2: A_hat @ XW1 -> ReLU -> @W2 = XW2 ----------------
    xw2 = pl.pallas_call(
        propagate_transform_kernel,
        out_shape=jax.ShapeDtypeStruct((n_p, h_p), compute_dtype),
        grid=(ni, nk),
        in_specs=[
            pl.BlockSpec((tm, tk), lambda i, k: (i, k)),     # adj row/col tile
            pl.BlockSpec((tk, h_p), lambda i, k: (k, 0)),    # XW1 column-tile rows
            pl.BlockSpec((1, h_p), lambda i, k: (0, 0)),     # b1
            pl.BlockSpec((h_p, h_p), lambda i, k: (0, 0)),   # W2
        ],
        out_specs=pl.BlockSpec((tm, h_p), lambda i, k: (i, 0)),
        scratch_shapes=[pltpu.VMEM((tm, h_p), jnp.float32)],
        compiler_params=pltpu.CompilerParams(
            dimension_semantics=("parallel", "arbitrary"),
            vmem_limit_bytes=VMEM_LIMIT),
        cost_estimate=pl.CostEstimate(
            flops=2 * n_p * n_p * h_p + 2 * n_p * h_p * h_p,
            transcendentals=0,
            bytes_accessed=2 * n_p * n_p + 4 * n_p * h_p),
    )(adj, xw1, b1, w2)

    # -------- kernel 3: A_hat @ XW2 -> ReLU -> Linear -> log_softmax --------
    out_padded = pl.pallas_call(
        functools.partial(propagate_head_kernel, out_dim=out_dim),
        out_shape=jax.ShapeDtypeStruct((n_p, o_p), jnp.float32),
        grid=(ni, nk),
        in_specs=[
            pl.BlockSpec((tm, tk), lambda i, k: (i, k)),     # adj
            pl.BlockSpec((tk, h_p), lambda i, k: (k, 0)),    # XW2
            pl.BlockSpec((1, h_p), lambda i, k: (0, 0)),     # b2
            pl.BlockSpec((h_p, o_p), lambda i, k: (0, 0)),   # W_lin
            pl.BlockSpec((1, o_p), lambda i, k: (0, 0)),     # b_lin
        ],
        out_specs=pl.BlockSpec((tm, o_p), lambda i, k: (i, 0)),
        scratch_shapes=[pltpu.VMEM((tm, h_p), jnp.float32)],
        compiler_params=pltpu.CompilerParams(
            dimension_semantics=("parallel", "arbitrary"),
            vmem_limit_bytes=VMEM_LIMIT),
        cost_estimate=pl.CostEstimate(
            flops=2 * n_p * n_p * h_p + 2 * n_p * h_p * o_p,
            transcendentals=n_p * o_p,
            bytes_accessed=2 * n_p * n_p + 2 * n_p * h_p + 4 * n_p * o_p),
    )(adj, xw2, b2, w_lin, b_lin)

    # slice away node and lane padding
    return out_padded[:N, :out_dim]


def init_params(key, high_dim, low_dim, emb_dim, hidden, out_dim):
    ks = jax.random.split(key, 8)
    s = 0.1
    return {
        # nn.Linear(low_dim, emb_dim): stored pre-transposed as [low_dim, emb_dim]
        "w_emb": s * jax.random.normal(ks[0], (low_dim, emb_dim), jnp.float32),
        "b_emb": s * jax.random.normal(ks[1], (emb_dim,), jnp.float32),
        # GCNConv(high_dim + emb_dim, hidden): weight [in, hidden], bias [hidden]
        "w1": s * jax.random.normal(ks[2], (high_dim + emb_dim, hidden), jnp.float32),
        "b1": s * jax.random.normal(ks[3], (hidden,), jnp.float32),
        # GCNConv(hidden, hidden)
        "w2": s * jax.random.normal(ks[4], (hidden, hidden), jnp.float32),
        "b2": s * jax.random.normal(ks[5], (hidden,), jnp.float32),
        # nn.Linear(hidden, out_dim): stored pre-transposed as [hidden, out_dim]
        "w_lin": s * jax.random.normal(ks[6], (hidden, out_dim), jnp.float32),
        "b_lin": s * jax.random.normal(ks[7], (out_dim,), jnp.float32),
    }


def reference_forward(high, low, edge_index, params):
    """Pure-JAX f32 reference of the same forward pass (for verification)."""
    N = high.shape[0]
    adj = build_normalized_adjacency(edge_index, N)
    emb = jax.nn.relu(low @ params["w_emb"] + params["b_emb"])
    x = jnp.concatenate([high, emb], axis=1)
    h1 = jax.nn.relu(adj @ (x @ params["w1"]) + params["b1"])
    h2 = jax.nn.relu(adj @ (h1 @ params["w2"]) + params["b2"])
    logits = h2 @ params["w_lin"] + params["b_lin"]
    return jax.nn.log_softmax(logits, axis=1)


if __name__ == "__main__":
    # small deterministic problem
    N = 16                    # number of graph nodes
    HIGH_DIM = 12             # high_dim_input_size
    LOW_DIM = 6               # low_dim_input_size
    EMB_DIM = 8               # embedding_dim
    HIDDEN = 32               # hidden_channels
    OUT_DIM = 4               # output_dim
    E = 32                    # number of edges

    key = jax.random.PRNGKey(0)
    k_high, k_low, k_src, k_dst, k_par = jax.random.split(key, 5)

    high = jax.random.normal(k_high, (N, HIGH_DIM), jnp.float32)
    low = jax.random.normal(k_low, (N, LOW_DIM), jnp.float32)
    edge_index = jnp.stack([
        jax.random.randint(k_src, (E,), 0, N, dtype=jnp.int32),
        jax.random.randint(k_dst, (E,), 0, N, dtype=jnp.int32),
    ], axis=0)                 # [2, E]

    params = init_params(k_par, HIGH_DIM, LOW_DIM, EMB_DIM, HIDDEN, OUT_DIM)

    out = combined_gcn_forward(high, low, edge_index, params)
    out = jax.block_until_ready(out)

    assert out.shape == (N, OUT_DIM)
    # rows of log_softmax should exp-sum to 1
    assert bool(jnp.allclose(jnp.sum(jnp.exp(out), axis=1), 1.0, atol=1e-3))
    # loose match against pure-JAX f32 reference (kernel uses bf16 operands)
    ref = reference_forward(high, low, edge_index, params)
    assert bool(jnp.max(jnp.abs(out - ref)) < 0.1)
    print("KERNEL_OK")
</pallas_src>

<mosaic_0001>
module attributes {stable_mosaic.version = 11 : i64} {
  func.func @transform_kernel(%arg0: i32, %arg1: memref<256x128xbf16, #tpu.memory_space<vmem>>, %arg2: memref<256x128xbf16, #tpu.memory_space<vmem>>, %arg3: memref<128x128xbf16, #tpu.memory_space<vmem>>, %arg4: memref<1x128xf32, #tpu.memory_space<vmem>>, %arg5: memref<128x128xbf16, #tpu.memory_space<vmem>>, %arg6: memref<128x128xbf16, #tpu.memory_space<vmem>>, %arg7: memref<256x128xbf16, #tpu.memory_space<vmem>>) attributes {dimension_semantics = [#tpu.dimension_semantics<parallel>], iteration_bounds = array<i64: 1>, scalar_prefetch = 0 : i64, scratch_operands = 0 : i64, tpu.core_type = #tpu.core_type<tc>, window_params = [{transform_indices = @transform_0, window_bounds = array<i64: 256, 128>}, {transform_indices = @transform_1, window_bounds = array<i64: 256, 128>}, {pipeline_mode = #tpu.pipeline_mode<synchronous>, transform_indices = @transform_2, window_bounds = array<i64: 128, 128>}, {pipeline_mode = #tpu.pipeline_mode<synchronous>, transform_indices = @transform_3, window_bounds = array<i64: 1, 128>}, {pipeline_mode = #tpu.pipeline_mode<synchronous>, transform_indices = @transform_4, window_bounds = array<i64: 128, 128>}, {pipeline_mode = #tpu.pipeline_mode<synchronous>, transform_indices = @transform_5, window_bounds = array<i64: 128, 128>}, {transform_indices = @transform_6, window_bounds = array<i64: 256, 128>}]} {
    %c0 = arith.constant 0 : index
    %c0_0 = arith.constant 0 : index
    %0 = vector.load %arg2[%c0, %c0_0] : memref<256x128xbf16, #tpu.memory_space<vmem>>, vector<256x128xbf16>
    %c0_1 = arith.constant 0 : index
    %c0_2 = arith.constant 0 : index
    %1 = vector.load %arg3[%c0_1, %c0_2] : memref<128x128xbf16, #tpu.memory_space<vmem>>, vector<128x128xbf16>
    %cst = arith.constant dense<0.000000e+00> : vector<256x128xf32>
    %2 = tpu.matmul %0, %1, %cst {dimension_numbers = #tpu.dot_dimension_numbers<[1], [0], [0], [1], [0, 0, 1, 1], [], []>} : vector<256x128xbf16>, vector<128x128xbf16>, vector<256x128xf32> -> vector<256x128xf32>
    %c0_3 = arith.constant 0 : index
    %c0_4 = arith.constant 0 : index
    %3 = vector.load %arg4[%c0_3, %c0_4] : memref<1x128xf32, #tpu.memory_space<vmem>>, vector<1x128xf32>
    %4 = vector.broadcast %3 : vector<1x128xf32> to vector<256x128xf32>
    %5 = arith.addf %2, %4 : vector<256x128xf32>
    %cst_5 = arith.constant 0.000000e+00 : f32
    %6 = vector.broadcast %cst_5 : f32 to vector<256x128xf32>
    %7 = arith.maximumf %5, %6 : vector<256x128xf32>
    %c0_6 = arith.constant 0 : index
    %c0_7 = arith.constant 0 : index
    %8 = vector.load %arg1[%c0_6, %c0_7] : memref<256x128xbf16, #tpu.memory_space<vmem>>, vector<256x128xbf16>
    %c0_8 = arith.constant 0 : index
    %c0_9 = arith.constant 0 : index
    %9 = vector.load %arg5[%c0_8, %c0_9] : memref<128x128xbf16, #tpu.memory_space<vmem>>, vector<128x128xbf16>
    %cst_10 = arith.constant dense<0.000000e+00> : vector<256x128xf32>
    %10 = tpu.matmul %8, %9, %cst_10 {dimension_numbers = #tpu.dot_dimension_numbers<[1], [0], [0], [1], [0, 0, 1, 1], [], []>} : vector<256x128xbf16>, vector<128x128xbf16>, vector<256x128xf32> -> vector<256x128xf32>
    %11 = arith.truncf %7 : vector<256x128xf32> to vector<256x128xbf16>
    %c0_11 = arith.constant 0 : index
    %c0_12 = arith.constant 0 : index
    %12 = vector.load %arg6[%c0_11, %c0_12] : memref<128x128xbf16, #tpu.memory_space<vmem>>, vector<128x128xbf16>
    %cst_13 = arith.constant dense<0.000000e+00> : vector<256x128xf32>
    %13 = tpu.matmul %11, %12, %cst_13 {dimension_numbers = #tpu.dot_dimension_numbers<[1], [0], [0], [1], [0, 0, 1, 1], [], []>} : vector<256x128xbf16>, vector<128x128xbf16>, vector<256x128xf32> -> vector<256x128xf32>
    %14 = arith.addf %10, %13 : vector<256x128xf32>
    %15 = arith.truncf %14 : vector<256x128xf32> to vector<256x128xbf16>
    %c0_14 = arith.constant 0 : index
    %c0_15 = arith.constant 0 : index
    %16 = vector.load %arg7[%c0_14, %c0_15] : memref<256x128xbf16, #tpu.memory_space<vmem>>, vector<256x128xbf16>
    tpu.vector_store %arg7[%c0_14, %c0_15], %15 {strides = array<i32>} : memref<256x128xbf16, #tpu.memory_space<vmem>>, vector<256x128xbf16>,
    return
  }
  func.func @transform_0(%arg0: i32) -> (i32, i32) {
    %c0_i32 = arith.constant 0 : i32
    %c0_i32_0 = arith.constant 0 : i32
    return %arg0, %c0_i32 : i32, i32
  }
  func.func @transform_1(%arg0: i32) -> (i32, i32) {
    %c0_i32 = arith.constant 0 : i32
    %c0_i32_0 = arith.constant 0 : i32
    return %arg0, %c0_i32 : i32, i32
  }
  func.func @transform_2(%arg0: i32) -> (i32, i32) {
    %c0_i32 = arith.constant 0 : i32
    %c0_i32_0 = arith.constant 0 : i32
    %c0_i32_1 = arith.constant 0 : i32
    return %c0_i32, %c0_i32_0 : i32, i32
  }
  func.func @transform_3(%arg0: i32) -> (i32, i32) {
    %c0_i32 = arith.constant 0 : i32
    %c0_i32_0 = arith.constant 0 : i32
    %c0_i32_1 = arith.constant 0 : i32
    return %c0_i32, %c0_i32_0 : i32, i32
  }
  func.func @transform_4(%arg0: i32) -> (i32, i32) {
    %c0_i32 = arith.constant 0 : i32
    %c0_i32_0 = arith.constant 0 : i32
    %c0_i32_1 = arith.constant 0 : i32
    return %c0_i32, %c0_i32_0 : i32, i32
  }
  func.func @transform_5(%arg0: i32) -> (i32, i32) {
    %c0_i32 = arith.constant 0 : i32
    %c0_i32_0 = arith.constant 0 : i32
    %c0_i32_1 = arith.constant 0 : i32
    return %c0_i32, %c0_i32_0 : i32, i32
  }
  func.func @transform_6(%arg0: i32) -> (i32, i32) {
    %c0_i32 = arith.constant 0 : i32
    %c0_i32_0 = arith.constant 0 : i32
    return %arg0, %c0_i32 : i32, i32
  }
}

</mosaic_0001>

<llo_original>
// kernel: tpu_custom_call.1
$region0: #{tpu_custom_call.1}
  #allocation0 [shape = 'u32[]', space=smem, size = 0x4, offset = 0x4, fixed_abs, tag = 'smem constant byte address 0x4 - core index']
  #allocation1 [shape = 'u32[144,128]{1,0:T(1,128)}', space=vmem, size = 0x12000, scoped, tag = 'internal scratch']
  %s0 = inlined_call_operand.hbm [shape: bf16[256,128], index: 0, kind: input, shape index: {}]
  %s1 = inlined_call_operand.hbm [shape: bf16[256,128], index: 1, kind: input, shape index: {}]
  %s2 = inlined_call_operand.hbm [shape: bf16[128,128], index: 2, kind: input, shape index: {}]
  %s3 = inlined_call_operand.vmem [shape: f32[1,128], index: 3, kind: input, shape index: {}]
  %s4 = inlined_call_operand.hbm [shape: bf16[128,128], index: 4, kind: input, shape index: {}]
  %s5 = inlined_call_operand.hbm [shape: bf16[128,128], index: 5, kind: input, shape index: {}]
  %s6 = inlined_call_operand.hbm [shape: bf16[256,128], index: 6, kind: output, shape index: {}]
  %s7 = sld [smem:[#allocation0]]
  $region54: #{tpu_custom_call.1} parent=0
    _
  %s9 = ssub.s32 1, %s7
  %s10 = scalar_select 0, %s9, %s7
  $region1: #{tpu_custom_call.1} parent=0
    #allocation2 [shape = 'u8[65536]{0}', space=vmem, size = 0x10000, scoped, tag = 'input window, operand 0, single buffered']
    #allocation3 [shape = 's32[1]{0}', space=sflag, size = 0x4, scoped, tag = 'scoped memory for tpu_custom_call.1']
    #allocation4 [shape = 's32[1]{0}', space=sflag, size = 0x4, scoped, tag = 'scoped memory for tpu_custom_call.1']
    #allocation5 [shape = 'u8[65536]{0}', space=vmem, size = 0x10000, scoped, tag = 'input window, operand 1, single buffered']
    #allocation6 [shape = 's32[1]{0}', space=sflag, size = 0x4, scoped, tag = 'scoped memory for tpu_custom_call.1']
    #allocation7 [shape = 'u8[32768]{0}', space=vmem, size = 0x8000, scoped, tag = 'input window, operand 2, single buffered']
    #allocation8 [shape = 'u8[32768]{0}', space=vmem, size = 0x8000, scoped, tag = 'input window, operand 4, single buffered']
    #allocation9 [shape = 's32[1]{0}', space=sflag, size = 0x4, scoped, tag = 'scoped memory for tpu_custom_call.1']
    #allocation10 [shape = 'u8[32768]{0}', space=vmem, size = 0x8000, scoped, tag = 'input window, operand 5, single buffered']
    #allocation11 [shape = 'u8[65536]{0}', space=vmem, size = 0x10000, scoped, tag = 'output window, operand 0, single buffered']
    %11 = vsyncpa [#allocation3], 0
    %12 = vsyncpa [#allocation6], 0
    %13 = vsyncpa [#allocation9], 0
    %14 = vsyncpa [#allocation4], 0
    // Predicated region
    $region2: #{tpu_custom_call.1} parent=1 // pred_check
      _
    $region3: #{tpu_custom_call.1} parent=1 // pred_check_branch
      %16 = sbr.rel (0) target = $region5
    $region4: #{tpu_custom_call.1} parent=1 // pred_region
      %s18 = ssub.s32 2048, 2048
      %19 = vsyncadd [#allocation3], %s18
      %s20 = sshll.u32 [#allocation2], 4
      %s21 = int_to_ptr.vmem [resolvable:$true] %s20
      %26 = dma.hbm_to_vmem [thread:$0]  %s0, 2048, %s21, [#allocation3], 64, 64, 4
    $region5: #{tpu_custom_call.1} parent=1 // pred_fallthru
      _
    // Predicated region
    $region6: #{tpu_custom_call.1} parent=1 // pred_check
      _
    $region7: #{tpu_custom_call.1} parent=1 // pred_check_branch
      %28 = sbr.rel (0) target = $region9
    $region8: #{tpu_custom_call.1} parent=1 // pred_region
      %s30 = ssub.s32 2048, 2048
      %31 = vsyncadd [#allocation6], %s30
      %s32 = sshll.u32 [#allocation5], 4
      %s33 = int_to_ptr.vmem [resolvable:$true] %s32
      %38 = dma.hbm_to_vmem [thread:$0]  %s1, 2048, %s33, [#allocation6], 64, 64, 4
    $region9: #{tpu_custom_call.1} parent=1 // pred_fallthru
      _
    // Predicated region
    $region10: #{tpu_custom_call.1} parent=1 // pred_check
      _
    $region11: #{tpu_custom_call.1} parent=1 // pred_check_branch
      %40 = sbr.rel (0) target = $region13
    $region12: #{tpu_custom_call.1} parent=1 // pred_region
      %s42 = ssub.s32 1024, 1024
      %43 = vsyncadd [#allocation6], %s42
      %s44 = sshll.u32 [#allocation7], 4
      %s45 = int_to_ptr.vmem [resolvable:$true] %s44
      %50 = dma.hbm_to_vmem [thread:$0]  %s2, 1024, %s45, [#allocation6], 64, 64, 4
    $region13: #{tpu_custom_call.1} parent=1 // pred_fallthru
      _
    // Predicated region
    $region14: #{tpu_custom_call.1} parent=1 // pred_check
      _
    $region15: #{tpu_custom_call.1} parent=1 // pred_check_branch
      %52 = sbr.rel (0) target = $region17
    $region16: #{tpu_custom_call.1} parent=1 // pred_region
      _
    $region17: #{tpu_custom_call.1} parent=1 // pred_fallthru
      _
    // Predicated region
    $region18: #{tpu_custom_call.1} parent=1 // pred_check
      _
    $region19: #{tpu_custom_call.1} parent=1 // pred_check_branch
      %54 = sbr.rel (0) target = $region21
    $region20: #{tpu_custom_call.1} parent=1 // pred_region
      %s56 = ssub.s32 1024, 1024
      %57 = vsyncadd [#allocation9], %s56
      %s58 = sshll.u32 [#allocation8], 4
      %s59 = int_to_ptr.vmem [resolvable:$true] %s58
      %64 = dma.hbm_to_vmem [thread:$0]  %s4, 1024, %s59, [#allocation9], 64, 64, 4
    $region21: #{tpu_custom_call.1} parent=1 // pred_fallthru
      _
    // Predicated region
    $region22: #{tpu_custom_call.1} parent=1 // pred_check
      _
    $region23: #{tpu_custom_call.1} parent=1 // pred_check_branch
      %66 = sbr.rel (0) target = $region25
    $region24: #{tpu_custom_call.1} parent=1 // pred_region
      %s68 = ssub.s32 1024, 1024
      %69 = vsyncadd [#allocation9], %s68
      %s70 = sshll.u32 [#allocation10], 4
      %s71 = int_to_ptr.vmem [resolvable:$true] %s70
      %76 = dma.hbm_to_vmem [thread:$0]  %s5, 1024, %s71, [#allocation9], 64, 64, 4
    $region25: #{tpu_custom_call.1} parent=1 // pred_fallthru
      _
    // Predicated region
    $region26: #{tpu_custom_call.1} parent=1 // pred_check
      _
    $region27: #{tpu_custom_call.1} parent=1 // pred_check_branch
      %78 = sbr.rel (0) target = $region29
    $region28: #{tpu_custom_call.1} parent=1 // pred_region
      %79 = dma.done [#allocation3], 2048
    $region29: #{tpu_custom_call.1} parent=1 // pred_fallthru
      _
    // Predicated region
    $region30: #{tpu_custom_call.1} parent=1 // pred_check
      _
    $region31: #{tpu_custom_call.1} parent=1 // pred_check_branch
      %81 = sbr.rel (0) target = $region33
    $region32: #{tpu_custom_call.1} parent=1 // pred_region
      %82 = dma.done [#allocation6], 2048
    $region33: #{tpu_custom_call.1} parent=1 // pred_fallthru
      _
    // Predicated region
    $region34: #{tpu_custom_call.1} parent=1 // pred_check
      _
    $region35: #{tpu_custom_call.1} parent=1 // pred_check_branch
      %84 = sbr.rel (0) target = $region37
    $region36: #{tpu_custom_call.1} parent=1 // pred_region
      %85 = dma.done [#allocation6], 1024
    $region37: #{tpu_custom_call.1} parent=1 // pred_fallthru
      _
    // Predicated region
    $region38: #{tpu_custom_call.1} parent=1 // pred_check
      _
    $region39: #{tpu_custom_call.1} parent=1 // pred_check_branch
      %87 = sbr.rel (0) target = $region41
    $region40: #{tpu_custom_call.1} parent=1 // pred_region
      %88 = dma.done [#allocation9], 1024
    $region41: #{tpu_custom_call.1} parent=1 // pred_fallthru
      _
    // Predicated region
    $region42: #{tpu_custom_call.1} parent=1 // pred_check
      _
    $region43: #{tpu_custom_call.1} parent=1 // pred_check_branch
      %90 = sbr.rel (0) target = $region45
    $region44: #{tpu_custom_call.1} parent=1 // pred_region
      %91 = dma.done [#allocation9], 1024
    $region45: #{tpu_custom_call.1} parent=1 // pred_fallthru
      _
    %v93 = vld [vmem:[#allocation5] sm:$0xf]
    %v94 = vld [vmem:[#allocation5 + $0x4] sm:$0xf]
    %v95 = vld [vmem:[#allocation5 + $0x8] sm:$0xf]
    %v96 = vld [vmem:[#allocation5 + $0xc] sm:$0xf]
    %v97 = vld [vmem:[#allocation5 + $0x10] sm:$0xf]
    %v98 = vld [vmem:[#allocation5 + $0x14] sm:$0xf]
    %v99 = vld [vmem:[#allocation5 + $0x18] sm:$0xf]
    %v100 = vld [vmem:[#allocation5 + $0x1c] sm:$0xf]
    %v101 = vld [vmem:[#allocation5 + $0x20] sm:$0xf]
    %v102 = vld [vmem:[#allocation5 + $0x24] sm:$0xf]
    %v103 = vld [vmem:[#allocation5 + $0x28] sm:$0xf]
    %v104 = vld [vmem:[#allocation5 + $0x2c] sm:$0xf]
    %v105 = vld [vmem:[#allocation5 + $0x30] sm:$0xf]
    %v106 = vld [vmem:[#allocation5 + $0x34] sm:$0xf]
    %v107 = vld [vmem:[#allocation5 + $0x38] sm:$0xf]
    %v108 = vld [vmem:[#allocation5 + $0x3c] sm:$0xf]
    %v109 = vld [vmem:[#allocation5 + $0x40] sm:$0xf]
    %v110 = vld [vmem:[#allocation5 + $0x44] sm:$0xf]
    %v111 = vld [vmem:[#allocation5 + $0x48] sm:$0xf]
    %v112 = vld [vmem:[#allocation5 + $0x4c] sm:$0xf]
    %v113 = vld [vmem:[#allocation5 + $0x50] sm:$0xf]
    %v114 = vld [vmem:[#allocation5 + $0x54] sm:$0xf]
    %v115 = vld [vmem:[#allocation5 + $0x58] sm:$0xf]
    %v116 = vld [vmem:[#allocation5 + $0x5c] sm:$0xf]
    %v117 = vld [vmem:[#allocation5 + $0x60] sm:$0xf]
    %v118 = vld [vmem:[#allocation5 + $0x64] sm:$0xf]
    %v119 = vld [vmem:[#allocation5 + $0x68] sm:$0xf]
    %v120 = vld [vmem:[#allocation5 + $0x6c] sm:$0xf]
    %v121 = vld [vmem:[#allocation5 + $0x70] sm:$0xf]
    %v122 = vld [vmem:[#allocation5 + $0x74] sm:$0xf]
    %v123 = vld [vmem:[#allocation5 + $0x78] sm:$0xf]
    %v124 = vld [vmem:[#allocation5 + $0x7c] sm:$0xf]
    %v125 = vld [vmem:[#allocation7] sm:$0xf]
    %v126 = vld [vmem:[#allocation7 + $0x4] sm:$0xf]
    %v127 = vld [vmem:[#allocation7 + $0x8] sm:$0xf]
    %v128 = vld [vmem:[#allocation7 + $0xc] sm:$0xf]
    %v129 = vld [vmem:[#allocation7 + $0x10] sm:$0xf]
    %v130 = vld [vmem:[#allocation7 + $0x14] sm:$0xf]
    %v131 = vld [vmem:[#allocation7 + $0x18] sm:$0xf]
    %v132 = vld [vmem:[#allocation7 + $0x1c] sm:$0xf]
    %v133 = vld [vmem:[#allocation7 + $0x20] sm:$0xf]
    %v134 = vld [vmem:[#allocation7 + $0x24] sm:$0xf]
    %v135 = vld [vmem:[#allocation7 + $0x28] sm:$0xf]
    %v136 = vld [vmem:[#allocation7 + $0x2c] sm:$0xf]
    %v137 = vld [vmem:[#allocation7 + $0x30] sm:$0xf]
    %v138 = vld [vmem:[#allocation7 + $0x34] sm:$0xf]
    %v139 = vld [vmem:[#allocation7 + $0x38] sm:$0xf]
    %v140 = vld [vmem:[#allocation7 + $0x3c] sm:$0xf]
    %v141 = vld [vmem:[%s3] sm:$0x1]
    %v143 = vlaneseq
    %v144 = vshrl.u32 %v143, 7
    %v145 = vsub.s32 0, %v144
    %v146 = vrot.slane %v141, %v145
    %v180 = vunpack.c.l.b16 %v93
    %v181 = vunpack.c.l.b16 %v94
    %v182 = vunpack.c.l.b16 %v95
    %v183 = vunpack.c.l.b16 %v96
    %v184 = vunpack.c.l.b16 %v97
    %v185 = vunpack.c.l.b16 %v98
    %v186 = vunpack.c.l.b16 %v99
    %v187 = vunpack.c.l.b16 %v100
    %v188 = vunpack.c.l.b16 %v101
    %v189 = vunpack.c.l.b16 %v102
    %v190 = vunpack.c.l.b16 %v103
    %v191 = vunpack.c.l.b16 %v104
    %v192 = vunpack.c.l.b16 %v105
    %v193 = vunpack.c.l.b16 %v106
    %v194 = vunpack.c.l.b16 %v107
    %v195 = vunpack.c.l.b16 %v108
    %v196 = vunpack.c.l.b16 %v109
    %v197 = vunpack.c.l.b16 %v110
    %v198 = vunpack.c.l.b16 %v111
    %v199 = vunpack.c.l.b16 %v112
    %v200 = vunpack.c.l.b16 %v113
    %v201 = vunpack.c.l.b16 %v114
    %v202 = vunpack.c.l.b16 %v115
    %v203 = vunpack.c.l.b16 %v116
    %v204 = vunpack.c.l.b16 %v117
    %v205 = vunpack.c.l.b16 %v118
    %v206 = vunpack.c.l.b16 %v119
    %v207 = vunpack.c.l.b16 %v120
    %v208 = vunpack.c.l.b16 %v121
    %v209 = vunpack.c.l.b16 %v122
    %v210 = vunpack.c.l.b16 %v123
    %v211 = vunpack.c.l.b16 %v124
    %v212 = vpack.c.b16 %v181, %v180
    %v213 = vpack.c.b16 %v183, %v182
    %v214 = vpack.c.b16 %v185, %v184
    %v215 = vpack.c.b16 %v187, %v186
    %v216 = vpack.c.b16 %v189, %v188
    %v217 = vpack.c.b16 %v191, %v190
    %v218 = vpack.c.b16 %v193, %v192
    %v219 = vpack.c.b16 %v195, %v194
    %v220 = vpack.c.b16 %v197, %v196
    %v221 = vpack.c.b16 %v199, %v198
    %v222 = vpack.c.b16 %v201, %v200
    %v223 = vpack.c.b16 %v203, %v202
    %v224 = vpack.c.b16 %v205, %v204
    %v225 = vpack.c.b16 %v207, %v206
    %v226 = vpack.c.b16 %v209, %v208
    %v227 = vpack.c.b16 %v211, %v210
    %v260 = vunpack.c.l.b16 %v125
    %v261 = vunpack.c.l.b16 %v126
    %v262 = vunpack.c.l.b16 %v127
    %v263 = vunpack.c.l.b16 %v128
    %v264 = vunpack.c.l.b16 %v129
    %v265 = vunpack.c.l.b16 %v130
    %v266 = vunpack.c.l.b16 %v131
    %v267 = vunpack.c.l.b16 %v132
    %v268 = vunpack.c.l.b16 %v133
    %v269 = vunpack.c.l.b16 %v134
    %v270 = vunpack.c.l.b16 %v135
    %v271 = vunpack.c.l.b16 %v136
    %v272 = vunpack.c.l.b16 %v137
    %v273 = vunpack.c.l.b16 %v138
    %v274 = vunpack.c.l.b16 %v139
    %v275 = vunpack.c.l.b16 %v140
    %v276 = vpack.c.b16 %v261, %v260
    %v277 = vpack.c.b16 %v263, %v262
    %v278 = vpack.c.b16 %v265, %v264
    %v279 = vpack.c.b16 %v267, %v266
    %v280 = vpack.c.b16 %v269, %v268
    %v281 = vpack.c.b16 %v271, %v270
    %v282 = vpack.c.b16 %v273, %v272
    %v283 = vpack.c.b16 %v275, %v274
    %292 = vmatprep.subr.bf16.mxu0 0
    %293 = vmatpush1.bf16.msra.mxu0 %v276
    %294 = vmatprep.subr.bf16.mxu0 0
    %295 = vmatpush1.bf16.msra.mxu0 %v277
    %296 = vmatprep.subr.bf16.mxu0 0
    %297 = vmatpush1.bf16.msra.mxu0 %v278
    %298 = vmatprep.subr.bf16.mxu0 0
    %299 = vmatpush1.bf16.msra.mxu0 %v279
    %300 = vmatprep.subr.bf16.mxu0 0
    %301 = vmatpush1.bf16.msra.mxu0 %v280
    %302 = vmatprep.subr.bf16.mxu0 0
    %303 = vmatpush1.bf16.msra.mxu0 %v281
    %304 = vmatprep.subr.bf16.mxu0 0
    %305 = vmatpush1.bf16.msra.mxu0 %v282
    %306 = vmatprep.subr.bf16.mxu0 0
    %307 = vmatpush1.bf16.msra.mxu0 %v283
    %308 = vmatprep.subr.bf16.mxu0 0
    %309 = vmatpush1.bf16.msra.mxu0 0
    %310 = vmatprep.subr.bf16.mxu0 0
    %311 = vmatpush1.bf16.msra.mxu0 0
    %312 = vmatprep.subr.bf16.mxu0 0
    %313 = vmatpush1.bf16.msra.mxu0 0
    %314 = vmatprep.subr.bf16.mxu0 0
    %315 = vmatpush1.bf16.msra.mxu0 0
    %316 = vmatprep.subr.bf16.mxu0 0
    %317 = vmatpush1.bf16.msra.mxu0 0
    %318 = vmatprep.subr.bf16.mxu0 0
    %319 = vmatpush1.bf16.msra.mxu0 0
    %320 = vmatprep.subr.bf16.mxu0 0
    %321 = vmatpush1.bf16.msra.mxu0 0
    %322 = vmatprep.subr.bf16.mxu0 0
    %323 = vmatpush1.bf16.msra.mxu0 0
    %324 = vmatprep.mubr.bf16.mxu0 0
    %325 = vmatmul.mubr.bf16.gmra.mrb[0].mxu0 %v212
    %v326 = vpop.f32.mrb[0].mxu0
    %v327 = vadd.f32 %v146, %v326
    %v328 = vpop.f32.mrb[0].mxu0
    %v329 = vpop.f32.mrb[0].mxu0
    %v330 = vadd.f32 %v146, %v329
    %v331 = vpop.f32.mrb[0].mxu0
    %332 = vmatprep.mubr.bf16.mxu0 0
    %333 = vmatmul.mubr.bf16.gmra.mrb[0].mxu0 %v213
    %v334 = vpop.f32.mrb[0].mxu0
    %v335 = vadd.f32 %v146, %v334
    %v336 = vpop.f32.mrb[0].mxu0
    %v337 = vpop.f32.mrb[0].mxu0
    %v338 = vadd.f32 %v146, %v337
    %v339 = vpop.f32.mrb[0].mxu0
    %340 = vmatprep.mubr.bf16.mxu0 0
    %341 = vmatmul.mubr.bf16.gmra.mrb[0].mxu0 %v214
    %v342 = vpop.f32.mrb[0].mxu0
    %v343 = vadd.f32 %v146, %v342
    %v344 = vpop.f32.mrb[0].mxu0
    %v345 = vpop.f32.mrb[0].mxu0
    %v346 = vadd.f32 %v146, %v345
    %v347 = vpop.f32.mrb[0].mxu0
    %348 = vmatprep.mubr.bf16.mxu0 0
    %349 = vmatmul.mubr.bf16.gmra.mrb[0].mxu0 %v215
    %v350 = vpop.f32.mrb[0].mxu0
    %v351 = vadd.f32 %v146, %v350
    %v352 = vpop.f32.mrb[0].mxu0
    %v353 = vpop.f32.mrb[0].mxu0
    %v354 = vadd.f32 %v146, %v353
    %v355 = vpop.f32.mrb[0].mxu0
    %356 = vmatprep.mubr.bf16.mxu0 0
    %357 = vmatmul.mubr.bf16.gmra.mrb[0].mxu0 %v216
    %v358 = vpop.f32.mrb[0].mxu0
    %v359 = vadd.f32 %v146, %v358
    %v360 = vpop.f32.mrb[0].mxu0
    %v361 = vpop.f32.mrb[0].mxu0
    %v362 = vadd.f32 %v146, %v361
    %v363 = vpop.f32.mrb[0].mxu0
    %364 = vmatprep.mubr.bf16.mxu0 0
    %365 = vmatmul.mubr.bf16.gmra.mrb[0].mxu0 %v217
    %v366 = vpop.f32.mrb[0].mxu0
    %v367 = vadd.f32 %v146, %v366
    %v368 = vpop.f32.mrb[0].mxu0
    %v369 = vpop.f32.mrb[0].mxu0
    %v370 = vadd.f32 %v146, %v369
    %v371 = vpop.f32.mrb[0].mxu0
    %372 = vmatprep.mubr.bf16.mxu0 0
    %373 = vmatmul.mubr.bf16.gmra.mrb[0].mxu0 %v218
    %v374 = vpop.f32.mrb[0].mxu0
    %v375 = vadd.f32 %v146, %v374
    %v376 = vpop.f32.mrb[0].mxu0
    %v377 = vpop.f32.mrb[0].mxu0
    %v378 = vadd.f32 %v146, %v377
    %v379 = vpop.f32.mrb[0].mxu0
    %380 = vmatprep.mubr.bf16.mxu0 0
    %381 = vmatmul.mubr.bf16.gmra.mrb[0].mxu0 %v219
    %v382 = vpop.f32.mrb[0].mxu0
    %v383 = vadd.f32 %v146, %v382
    %v384 = vpop.f32.mrb[0].mxu0
    %v385 = vpop.f32.mrb[0].mxu0
    %v386 = vadd.f32 %v146, %v385
    %v387 = vpop.f32.mrb[0].mxu0
    %388 = vmatprep.mubr.bf16.mxu0 0
    %389 = vmatmul.mubr.bf16.gmra.mrb[0].mxu0 %v220
    %v390 = vpop.f32.mrb[0].mxu0
    %v391 = vadd.f32 %v146, %v390
    %v392 = vpop.f32.mrb[0].mxu0
    %v393 = vpop.f32.mrb[0].mxu0
    %v394 = vadd.f32 %v146, %v393
    %v395 = vpop.f32.mrb[0].mxu0
    %396 = vmatprep.mubr.bf16.mxu0 0
    %397 = vmatmul.mubr.bf16.gmra.mrb[0].mxu0 %v221
    %v398 = vpop.f32.mrb[0].mxu0
    %v399 = vadd.f32 %v146, %v398
    %v400 = vpop.f32.mrb[0].mxu0
    %v401 = vpop.f32.mrb[0].mxu0
    %v402 = vadd.f32 %v146, %v401
    %v403 = vpop.f32.mrb[0].mxu0
    %404 = vmatprep.mubr.bf16.mxu0 0
    %405 = vmatmul.mubr.bf16.gmra.mrb[0].mxu0 %v222
    %v406 = vpop.f32.mrb[0].mxu0
    %v407 = vadd.f32 %v146, %v406
    %v408 = vpop.f32.mrb[0].mxu0
    %v409 = vpop.f32.mrb[0].mxu0
    %v410 = vadd.f32 %v146, %v409
    %v411 = vpop.f32.mrb[0].mxu0
    %412 = vmatprep.mubr.bf16.mxu0 0
    %413 = vmatmul.mubr.bf16.gmra.mrb[0].mxu0 %v223
    %v414 = vpop.f32.mrb[0].mxu0
    %v415 = vadd.f32 %v146, %v414
    %v416 = vpop.f32.mrb[0].mxu0
    %v417 = vpop.f32.mrb[0].mxu0
    %v418 = vadd.f32 %v146, %v417
    %v419 = vpop.f32.mrb[0].mxu0
    %420 = vmatprep.mubr.bf16.mxu0 0
    %421 = vmatmul.mubr.bf16.gmra.mrb[0].mxu0 %v224
    %v422 = vpop.f32.mrb[0].mxu0
    %v423 = vadd.f32 %v146, %v422
    %v424 = vpop.f32.mrb[0].mxu0
    %v425 = vpop.f32.mrb[0].mxu0
    %v426 = vadd.f32 %v146, %v425
    %v427 = vpop.f32.mrb[0].mxu0
    %428 = vmatprep.mubr.bf16.mxu0 0
    %429 = vmatmul.mubr.bf16.gmra.mrb[0].mxu0 %v225
    %v430 = vpop.f32.mrb[0].mxu0
    %v431 = vadd.f32 %v146, %v430
    %v432 = vpop.f32.mrb[0].mxu0
    %v433 = vpop.f32.mrb[0].mxu0
    %v434 = vadd.f32 %v146, %v433
    %v435 = vpop.f32.mrb[0].mxu0
    %436 = vmatprep.mubr.bf16.mxu0 0
    %437 = vmatmul.mubr.bf16.gmra.mrb[0].mxu0 %v226
    %v438 = vpop.f32.mrb[0].mxu0
    %v439 = vadd.f32 %v146, %v438
    %v440 = vpop.f32.mrb[0].mxu0
    %v441 = vpop.f32.mrb[0].mxu0
    %v442 = vadd.f32 %v146, %v441
    %v443 = vpop.f32.mrb[0].mxu0
    %444 = vmatprep.mubr.bf16.mxu0 0
    %445 = vmatmul.mubr.bf16.gmra.mrb[0].mxu0 %v227
    %v446 = vpop.f32.mrb[0].mxu0
    %v447 = vadd.f32 %v146, %v446
    %v448 = vpop.f32.mrb[0].mxu0
    %v449 = vpop.f32.mrb[0].mxu0
    %v450 = vadd.f32 %v146, %v449
    %v451 = vpop.f32.mrb[0].mxu0
    %452 = vdwg.mxu0
    %v453 = vmax.f32 %v327, 0.0
    %v454 = vmax.f32 %v330, 0.0
    %v455 = vmax.f32 %v335, 0.0
    %v456 = vmax.f32 %v338, 0.0
    %v457 = vmax.f32 %v343, 0.0
    %v458 = vmax.f32 %v346, 0.0
    %v459 = vmax.f32 %v351, 0.0
    %v460 = vmax.f32 %v354, 0.0
    %v461 = vmax.f32 %v359, 0.0
    %v462 = vmax.f32 %v362, 0.0
    %v463 = vmax.f32 %v367, 0.0
    %v464 = vmax.f32 %v370, 0.0
    %v465 = vmax.f32 %v375, 0.0
    %v466 = vmax.f32 %v378, 0.0
    %v467 = vmax.f32 %v383, 0.0
    %v468 = vmax.f32 %v386, 0.0
    %v469 = vmax.f32 %v391, 0.0
    %v470 = vmax.f32 %v394, 0.0
    %v471 = vmax.f32 %v399, 0.0
    %v472 = vmax.f32 %v402, 0.0
    %v473 = vmax.f32 %v407, 0.0
    %v474 = vmax.f32 %v410, 0.0
    %v475 = vmax.f32 %v415, 0.0
    %v476 = vmax.f32 %v418, 0.0
    %v477 = vmax.f32 %v423, 0.0
    %v478 = vmax.f32 %v426, 0.0
    %v479 = vmax.f32 %v431, 0.0
    %v480 = vmax.f32 %v434, 0.0
    %v481 = vmax.f32 %v439, 0.0
    %v482 = vmax.f32 %v442, 0.0
    %v483 = vmax.f32 %v447, 0.0
    %v484 = vmax.f32 %v450, 0.0
    %v485 = vld [vmem:[#allocation2] sm:$0xf]
    %v486 = vld [vmem:[#allocation2 + $0x4] sm:$0xf]
    %v487 = vld [vmem:[#allocation2 + $0x8] sm:$0xf]
    %v488 = vld [vmem:[#allocation2 + $0xc] sm:$0xf]
    %v489 = vld [vmem:[#allocation2 + $0x10] sm:$0xf]
    %v490 = vld [vmem:[#allocation2 + $0x14] sm:$0xf]
    %v491 = vld [vmem:[#allocation2 + $0x18] sm:$0xf]
    %v492 = vld [vmem:[#allocation2 + $0x1c] sm:$0xf]
    %v493 = vld [vmem:[#allocation2 + $0x20] sm:$0xf]
    %v494 = vld [vmem:[#allocation2 + $0x24] sm:$0xf]
    %v495 = vld [vmem:[#allocation2 + $0x28] sm:$0xf]
    %v496 = vld [vmem:[#allocation2 + $0x2c] sm:$0xf]
    %v497 = vld [vmem:[#allocation2 + $0x30] sm:$0xf]
    %v498 = vld [vmem:[#allocation2 + $0x34] sm:$0xf]
    %v499 = vld [vmem:[#allocation2 + $0x38] sm:$0xf]
    %v500 = vld [vmem:[#allocation2 + $0x3c] sm:$0xf]
    %v501 = vld [vmem:[#allocation2 + $0x40] sm:$0xf]
    %v502 = vld [vmem:[#allocation2 + $0x44] sm:$0xf]
    %v503 = vld [vmem:[#allocation2 + $0x48] sm:$0xf]
    %v504 = vld [vmem:[#allocation2 + $0x4c] sm:$0xf]
    %v505 = vld [vmem:[#allocation2 + $0x50] sm:$0xf]
    %v506 = vld [vmem:[#allocation2 + $0x54] sm:$0xf]
    %v507 = vld [vmem:[#allocation2 + $0x58] sm:$0xf]
    %v508 = vld [vmem:[#allocation2 + $0x5c] sm:$0xf]
    %v509 = vld [vmem:[#allocation2 + $0x60] sm:$0xf]
    %v510 = vld [vmem:[#allocation2 + $0x64] sm:$0xf]
    %v511 = vld [vmem:[#allocation2 + $0x68] sm:$0xf]
    %v512 = vld [vmem:[#allocation2 + $0x6c] sm:$0xf]
    %v513 = vld [vmem:[#allocation2 + $0x70] sm:$0xf]
    %v514 = vld [vmem:[#allocation2 + $0x74] sm:$0xf]
    %v515 = vld [vmem:[#allocation2 + $0x78] sm:$0xf]
    %v516 = vld [vmem:[#allocation2 + $0x7c] sm:$0xf]
    %v517 = vld [vmem:[#allocation8] sm:$0xf]
    %v518 = vld [vmem:[#allocation8 + $0x4] sm:$0xf]
    %v519 = vld [vmem:[#allocation8 + $0x8] sm:$0xf]
    %v520 = vld [vmem:[#allocation8 + $0xc] sm:$0xf]
    %v521 = vld [vmem:[#allocation8 + $0x10] sm:$0xf]
    %v522 = vld [vmem:[#allocation8 + $0x14] sm:$0xf]
    %v523 = vld [vmem:[#allocation8 + $0x18] sm:$0xf]
    %v524 = vld [vmem:[#allocation8 + $0x1c] sm:$0xf]
    %v525 = vld [vmem:[#allocation8 + $0x20] sm:$0xf]
    %v526 = vld [vmem:[#allocation8 + $0x24] sm:$0xf]
    %v527 = vld [vmem:[#allocation8 + $0x28] sm:$0xf]
    %v528 = vld [vmem:[#allocation8 + $0x2c] sm:$0xf]
    %v529 = vld [vmem:[#allocation8 + $0x30] sm:$0xf]
    %v530 = vld [vmem:[#allocation8 + $0x34] sm:$0xf]
    %v531 = vld [vmem:[#allocation8 + $0x38] sm:$0xf]
    %v532 = vld [vmem:[#allocation8 + $0x3c] sm:$0xf]
    %v533 = vpack.c.bf16 %v454, %v453
    %v534 = vpack.c.bf16 %v456, %v455
    %v535 = vpack.c.bf16 %v458, %v457
    %v536 = vpack.c.bf16 %v460, %v459
    %v537 = vpack.c.bf16 %v462, %v461
    %v538 = vpack.c.bf16 %v464, %v463
    %v539 = vpack.c.bf16 %v466, %v465
    %v540 = vpack.c.bf16 %v468, %v467
    %v541 = vpack.c.bf16 %v470, %v469
    %v542 = vpack.c.bf16 %v472, %v471
    %v543 = vpack.c.bf16 %v474, %v473
    %v544 = vpack.c.bf16 %v476, %v475
    %v545 = vpack.c.bf16 %v478, %v477
    %v546 = vpack.c.bf16 %v480, %v479
    %v547 = vpack.c.bf16 %v482, %v481
    %v548 = vpack.c.bf16 %v484, %v483
    %v549 = vld [vmem:[#allocation10] sm:$0xf]
    %v550 = vld [vmem:[#allocation10 + $0x4] sm:$0xf]
    %v551 = vld [vmem:[#allocation10 + $0x8] sm:$0xf]
    %v552 = vld [vmem:[#allocation10 + $0xc] sm:$0xf]
    %v553 = vld [vmem:[#allocation10 + $0x10] sm:$0xf]
    %v554 = vld [vmem:[#allocation10 + $0x14] sm:$0xf]
    %v555 = vld [vmem:[#allocation10 + $0x18] sm:$0xf]
    %v556 = vld [vmem:[#allocation10 + $0x1c] sm:$0xf]
    %v557 = vld [vmem:[#allocation10 + $0x20] sm:$0xf]
    %v558 = vld [vmem:[#allocation10 + $0x24] sm:$0xf]
    %v559 = vld [vmem:[#allocation10 + $0x28] sm:$0xf]
    %v560 = vld [vmem:[#allocation10 + $0x2c] sm:$0xf]
    %v561 = vld [vmem:[#allocation10 + $0x30] sm:$0xf]
    %v562 = vld [vmem:[#allocation10 + $0x34] sm:$0xf]
    %v563 = vld [vmem:[#allocation10 + $0x38] sm:$0xf]
    %v564 = vld [vmem:[#allocation10 + $0x3c] sm:$0xf]
    %v581 = vunpack.c.l.b16 %v549
    %v582 = vunpack.c.l.b16 %v550
    %v583 = vunpack.c.l.b16 %v551
    %v584 = vunpack.c.l.b16 %v552
    %v585 = vunpack.c.l.b16 %v553
    %v586 = vunpack.c.l.b16 %v554
    %v587 = vunpack.c.l.b16 %v555
    %v588 = vunpack.c.l.b16 %v556
    %v589 = vunpack.c.l.b16 %v557
    %v590 = vunpack.c.l.b16 %v558
    %v591 = vunpack.c.l.b16 %v559
    %v592 = vunpack.c.l.b16 %v560
    %v593 = vunpack.c.l.b16 %v561
    %v594 = vunpack.c.l.b16 %v562
    %v595 = vunpack.c.l.b16 %v563
    %v596 = vunpack.c.l.b16 %v564
    %v597 = vpack.c.b16 %v582, %v581
    %v598 = vpack.c.b16 %v584, %v583
    %v599 = vpack.c.b16 %v586, %v585
    %v600 = vpack.c.b16 %v588, %v587
    %v601 = vpack.c.b16 %v590, %v589
    %v602 = vpack.c.b16 %v592, %v591
    %v603 = vpack.c.b16 %v594, %v593
    %v604 = vpack.c.b16 %v596, %v595
    %613 = vmatprep.subr.bf16.mxu0 0
    %614 = vmatpush1.bf16.msra.mxu0 %v597
    %615 = vmatprep.subr.bf16.mxu0 0
    %616 = vmatpush1.bf16.msra.mxu0 %v598
    %617 = vmatprep.subr.bf16.mxu0 0
    %618 = vmatpush1.bf16.msra.mxu0 %v599
    %619 = vmatprep.subr.bf16.mxu0 0
    %620 = vmatpush1.bf16.msra.mxu0 %v600
    %621 = vmatprep.subr.bf16.mxu0 0
    %622 = vmatpush1.bf16.msra.mxu0 %v601
    %623 = vmatprep.subr.bf16.mxu0 0
    %624 = vmatpush1.bf16.msra.mxu0 %v602
    %625 = vmatprep.subr.bf16.mxu0 0
    %626 = vmatpush1.bf16.msra.mxu0 %v603
    %627 = vmatprep.subr.bf16.mxu0 0
    %628 = vmatpush1.bf16.msra.mxu0 %v604
    %629 = vmatprep.subr.bf16.mxu0 0
    %630 = vmatpush1.bf16.msra.mxu0 0
    %631 = vmatprep.subr.bf16.mxu0 0
    %632 = vmatpush1.bf16.msra.mxu0 0
    %633 = vmatprep.subr.bf16.mxu0 0
    %634 = vmatpush1.bf16.msra.mxu0 0
    %635 = vmatprep.subr.bf16.mxu0 0
    %636 = vmatpush1.bf16.msra.mxu0 0
    %637 = vmatprep.subr.bf16.mxu0 0
    %638 = vmatpush1.bf16.msra.mxu0 0
    %639 = vmatprep.subr.bf16.mxu0 0
    %640 = vmatpush1.bf16.msra.mxu0 0
    %641 = vmatprep.subr.bf16.mxu0 0
    %642 = vmatpush1.bf16.msra.mxu0 0
    %643 = vmatprep.subr.bf16.mxu0 0
    %644 = vmatpush1.bf16.msra.mxu0 0
    %645 = vmatprep.mubr.bf16.mxu0 0
    %646 = vmatmul.mubr.bf16.gmra.mrb[0].mxu0 %v533
    %v647 = vpop.f32.mrb[0].mxu0
    %v648 = vadd.f32 0.0, %v647
    %v649 = vpop.f32.mrb[0].mxu0
    %v650 = vpop.f32.mrb[0].mxu0
    %v651 = vadd.f32 0.0, %v650
    %v652 = vpop.f32.mrb[0].mxu0
    %653 = vmatprep.mubr.bf16.mxu0 0
    %654 = vmatmul.mubr.bf16.gmra.mrb[0].mxu0 %v534
    %v655 = vpop.f32.mrb[0].mxu0
    %v656 = vadd.f32 0.0, %v655
    %v657 = vpop.f32.mrb[0].mxu0
    %v658 = vpop.f32.mrb[0].mxu0
    %v659 = vadd.f32 0.0, %v658
    %v660 = vpop.f32.mrb[0].mxu0
    %661 = vmatprep.mubr.bf16.mxu0 0
    %662 = vmatmul.mubr.bf16.gmra.mrb[0].mxu0 %v535
    %v663 = vpop.f32.mrb[0].mxu0
    %v664 = vadd.f32 0.0, %v663
    %v665 = vpop.f32.mrb[0].mxu0
    %v666 = vpop.f32.mrb[0].mxu0
    %v667 = vadd.f32 0.0, %v666
    %v668 = vpop.f32.mrb[0].mxu0
    %669 = vmatprep.mubr.bf16.mxu0 0
    %670 = vmatmul.mubr.bf16.gmra.mrb[0].mxu0 %v536
    %v671 = vpop.f32.mrb[0].mxu0
    %v672 = vadd.f32 0.0, %v671
    %v673 = vpop.f32.mrb[0].mxu0
    %v674 = vpop.f32.mrb[0].mxu0
    %v675 = vadd.f32 0.0, %v674
    %v676 = vpop.f32.mrb[0].mxu0
    %677 = vmatprep.mubr.bf16.mxu0 0
    %678 = vmatmul.mubr.bf16.gmra.mrb[0].mxu0 %v537
    %v679 = vpop.f32.mrb[0].mxu0
    %v680 = vadd.f32 0.0, %v679
    %v681 = vpop.f32.mrb[0].mxu0
    %v682 = vpop.f32.mrb[0].mxu0
    %v683 = vadd.f32 0.0, %v682
    %v684 = vpop.f32.mrb[0].mxu0
    %685 = vmatprep.mubr.bf16.mxu0 0
    %686 = vmatmul.mubr.bf16.gmra.mrb[0].mxu0 %v538
    %v687 = vpop.f32.mrb[0].mxu0
    %v688 = vadd.f32 0.0, %v687
    %v689 = vpop.f32.mrb[0].mxu0
    %v690 = vpop.f32.mrb[0].mxu0
    %v691 = vadd.f32 0.0, %v690
    %v692 = vpop.f32.mrb[0].mxu0
    %693 = vmatprep.mubr.bf16.mxu0 0
    %694 = vmatmul.mubr.bf16.gmra.mrb[0].mxu0 %v539
    %v695 = vpop.f32.mrb[0].mxu0
    %v696 = vadd.f32 0.0, %v695
    %v697 = vpop.f32.mrb[0].mxu0
    %v698 = vpop.f32.mrb[0].mxu0
    %v699 = vadd.f32 0.0, %v698
    %v700 = vpop.f32.mrb[0].mxu0
    %701 = vmatprep.mubr.bf16.mxu0 0
    %702 = vmatmul.mubr.bf16.gmra.mrb[0].mxu0 %v540
    %v703 = vpop.f32.mrb[0].mxu0
    %v704 = vadd.f32 0.0, %v703
    %v705 = vpop.f32.mrb[0].mxu0
    %v706 = vpop.f32.mrb[0].mxu0
    %v707 = vadd.f32 0.0, %v706
    %v708 = vpop.f32.mrb[0].mxu0
    %709 = vmatprep.mubr.bf16.mxu0 0
    %710 = vmatmul.mubr.bf16.gmra.mrb[0].mxu0 %v541
    %v711 = vpop.f32.mrb[0].mxu0
    %v712 = vadd.f32 0.0, %v711
    %v713 = vpop.f32.mrb[0].mxu0
    %v714 = vpop.f32.mrb[0].mxu0
    %v715 = vadd.f32 0.0, %v714
    %v716 = vpop.f32.mrb[0].mxu0
    %717 = vmatprep.mubr.bf16.mxu0 0
    %718 = vmatmul.mubr.bf16.gmra.mrb[0].mxu0 %v542
    %v719 = vpop.f32.mrb[0].mxu0
    %v720 = vadd.f32 0.0, %v719
    %v721 = vpop.f32.mrb[0].mxu0
    %v722 = vpop.f32.mrb[0].mxu0
    %v723 = vadd.f32 0.0, %v722
    %v724 = vpop.f32.mrb[0].mxu0
    %725 = vmatprep.mubr.bf16.mxu0 0
    %726 = vmatmul.mubr.bf16.gmra.mrb[0].mxu0 %v543
    %v727 = vpop.f32.mrb[0].mxu0
    %v728 = vadd.f32 0.0, %v727
    %v729 = vpop.f32.mrb[0].mxu0
    %v730 = vpop.f32.mrb[0].mxu0
    %v731 = vadd.f32 0.0, %v730
    %v732 = vpop.f32.mrb[0].mxu0
    %733 = vmatprep.mubr.bf16.mxu0 0
    %734 = vmatmul.mubr.bf16.gmra.mrb[0].mxu0 %v544
    %v735 = vpop.f32.mrb[0].mxu0
    %v736 = vadd.f32 0.0, %v735
    %v737 = vpop.f32.mrb[0].mxu0
    %v738 = vpop.f32.mrb[0].mxu0
    %v739 = vadd.f32 0.0, %v738
    %v740 = vpop.f32.mrb[0].mxu0
    %741 = vmatprep.mubr.bf16.mxu0 0
    %742 = vmatmul.mubr.bf16.gmra.mrb[0].mxu0 %v545
    %v743 = vpop.f32.mrb[0].mxu0
    %v744 = vadd.f32 0.0, %v743
    %v745 = vpop.f32.mrb[0].mxu0
    %v746 = vpop.f32.mrb[0].mxu0
    %v747 = vadd.f32 0.0, %v746
    %v748 = vpop.f32.mrb[0].mxu0
    %749 = vmatprep.mubr.bf16.mxu0 0
    %750 = vmatmul.mubr.bf16.gmra.mrb[0].mxu0 %v546
    %v751 = vpop.f32.mrb[0].mxu0
    %v752 = vadd.f32 0.0, %v751
    %v753 = vpop.f32.mrb[0].mxu0
    %v754 = vpop.f32.mrb[0].mxu0
    %v755 = vadd.f32 0.0, %v754
    %v756 = vpop.f32.mrb[0].mxu0
    %757 = vmatprep.mubr.bf16.mxu0 0
    %758 = vmatmul.mubr.bf16.gmra.mrb[0].mxu0 %v547
    %v759 = vpop.f32.mrb[0].mxu0
    %v760 = vadd.f32 0.0, %v759
    %v761 = vpop.f32.mrb[0].mxu0
    %v762 = vpop.f32.mrb[0].mxu0
    %v763 = vadd.f32 0.0, %v762
    %v764 = vpop.f32.mrb[0].mxu0
    %765 = vmatprep.mubr.bf16.mxu0 0
    %766 = vmatmul.mubr.bf16.gmra.mrb[0].mxu0 %v548
    %v767 = vpop.f32.mrb[0].mxu0
    %v768 = vadd.f32 0.0, %v767
    %v769 = vpop.f32.mrb[0].mxu0
    %v770 = vpop.f32.mrb[0].mxu0
    %v771 = vadd.f32 0.0, %v770
    %v772 = vpop.f32.mrb[0].mxu0
    %773 = vdwg.mxu0
    %v806 = vunpack.c.l.b16 %v485
    %v807 = vunpack.c.l.b16 %v486
    %v808 = vunpack.c.l.b16 %v487
    %v809 = vunpack.c.l.b16 %v488
    %v810 = vunpack.c.l.b16 %v489
    %v811 = vunpack.c.l.b16 %v490
    %v812 = vunpack.c.l.b16 %v491
    %v813 = vunpack.c.l.b16 %v492
    %v814 = vunpack.c.l.b16 %v493
    %v815 = vunpack.c.l.b16 %v494
    %v816 = vunpack.c.l.b16 %v495
    %v817 = vunpack.c.l.b16 %v496
    %v818 = vunpack.c.l.b16 %v497
    %v819 = vunpack.c.l.b16 %v498
    %v820 = vunpack.c.l.b16 %v499
    %v821 = vunpack.c.l.b16 %v500
    %v822 = vunpack.c.l.b16 %v501
    %v823 = vunpack.c.l.b16 %v502
    %v824 = vunpack.c.l.b16 %v503
    %v825 = vunpack.c.l.b16 %v504
    %v826 = vunpack.c.l.b16 %v505
    %v827 = vunpack.c.l.b16 %v506
    %v828 = vunpack.c.l.b16 %v507
    %v829 = vunpack.c.l.b16 %v508
    %v830 = vunpack.c.l.b16 %v509
    %v831 = vunpack.c.l.b16 %v510
    %v832 = vunpack.c.l.b16 %v511
    %v833 = vunpack.c.l.b16 %v512
    %v834 = vunpack.c.l.b16 %v513
    %v835 = vunpack.c.l.b16 %v514
    %v836 = vunpack.c.l.b16 %v515
    %v837 = vunpack.c.l.b16 %v516
    %v838 = vpack.c.b16 %v807, %v806
    %v839 = vpack.c.b16 %v809, %v808
    %v840 = vpack.c.b16 %v811, %v810
    %v841 = vpack.c.b16 %v813, %v812
    %v842 = vpack.c.b16 %v815, %v814
    %v843 = vpack.c.b16 %v817, %v816
    %v844 = vpack.c.b16 %v819, %v818
    %v845 = vpack.c.b16 %v821, %v820
    %v846 = vpack.c.b16 %v823, %v822
    %v847 = vpack.c.b16 %v825, %v824
    %v848 = vpack.c.b16 %v827, %v826
    %v849 = vpack.c.b16 %v829, %v828
    %v850 = vpack.c.b16 %v831, %v830
    %v851 = vpack.c.b16 %v833, %v832
    %v852 = vpack.c.b16 %v835, %v834
    %v853 = vpack.c.b16 %v837, %v836
    %v886 = vunpack.c.l.b16 %v517
    %v887 = vunpack.c.l.b16 %v518
    %v888 = vunpack.c.l.b16 %v519
    %v889 = vunpack.c.l.b16 %v520
    %v890 = vunpack.c.l.b16 %v521
    %v891 = vunpack.c.l.b16 %v522
    %v892 = vunpack.c.l.b16 %v523
    %v893 = vunpack.c.l.b16 %v524
    %v894 = vunpack.c.l.b16 %v525
    %v895 = vunpack.c.l.b16 %v526
    %v896 = vunpack.c.l.b16 %v527
    %v897 = vunpack.c.l.b16 %v528
    %v898 = vunpack.c.l.b16 %v529
    %v899 = vunpack.c.l.b16 %v530
    %v900 = vunpack.c.l.b16 %v531
    %v901 = vunpack.c.l.b16 %v532
    %v902 = vpack.c.b16 %v887, %v886
    %v903 = vpack.c.b16 %v889, %v888
    %v904 = vpack.c.b16 %v891, %v890
    %v905 = vpack.c.b16 %v893, %v892
    %v906 = vpack.c.b16 %v895, %v894
    %v907 = vpack.c.b16 %v897, %v896
    %v908 = vpack.c.b16 %v899, %v898
    %v909 = vpack.c.b16 %v901, %v900
    %918 = vmatprep.subr.bf16.mxu0 0
    %919 = vmatpush1.bf16.msra.mxu0 %v902
    %920 = vmatprep.subr.bf16.mxu0 0
    %921 = vmatpush1.bf16.msra.mxu0 %v903
    %922 = vmatprep.subr.bf16.mxu0 0
    %923 = vmatpush1.bf16.msra.mxu0 %v904
    %924 = vmatprep.subr.bf16.mxu0 0
    %925 = vmatpush1.bf16.msra.mxu0 %v905
    %926 = vmatprep.subr.bf16.mxu0 0
    %927 = vmatpush1.bf16.msra.mxu0 %v906
    %928 = vmatprep.subr.bf16.mxu0 0
    %929 = vmatpush1.bf16.msra.mxu0 %v907
    %930 = vmatprep.subr.bf16.mxu0 0
    %931 = vmatpush1.bf16.msra.mxu0 %v908
    %932 = vmatprep.subr.bf16.mxu0 0
    %933 = vmatpush1.bf16.msra.mxu0 %v909
    %934 = vmatprep.subr.bf16.mxu0 0
    %935 = vmatpush1.bf16.msra.mxu0 0
    %936 = vmatprep.subr.bf16.mxu0 0
    %937 = vmatpush1.bf16.msra.mxu0 0
    %938 = vmatprep.subr.bf16.mxu0 0
    %939 = vmatpush1.bf16.msra.mxu0 0
    %940 = vmatprep.subr.bf16.mxu0 0
    %941 = vmatpush1.bf16.msra.mxu0 0
    %942 = vmatprep.subr.bf16.mxu0 0
    %943 = vmatpush1.bf16.msra.mxu0 0
    %944 = vmatprep.subr.bf16.mxu0 0
    %945 = vmatpush1.bf16.msra.mxu0 0
    %946 = vmatprep.subr.bf16.mxu0 0
    %947 = vmatpush1.bf16.msra.mxu0 0
    %948 = vmatprep.subr.bf16.mxu0 0
    %949 = vmatpush1.bf16.msra.mxu0 0
    %950 = vmatprep.mubr.bf16.mxu0 0
    %951 = vmatmul.mubr.bf16.gmra.mrb[0].mxu0 %v838
    %v952 = vpop.f32.mrb[0].mxu0
    %v953 = vadd.f32 %v648, %v952
    %v954 = vpop.f32.mrb[0].mxu0
    %v955 = vpop.f32.mrb[0].mxu0
    %v956 = vadd.f32 %v651, %v955
    %v957 = vpop.f32.mrb[0].mxu0
    %958 = vmatprep.mubr.bf16.mxu0 0
    %959 = vmatmul.mubr.bf16.gmra.mrb[0].mxu0 %v839
    %v960 = vpop.f32.mrb[0].mxu0
    %v961 = vadd.f32 %v656, %v960
    %v962 = vpop.f32.mrb[0].mxu0
    %v963 = vpop.f32.mrb[0].mxu0
    %v964 = vadd.f32 %v659, %v963
    %v965 = vpop.f32.mrb[0].mxu0
    %966 = vmatprep.mubr.bf16.mxu0 0
    %967 = vmatmul.mubr.bf16.gmra.mrb[0].mxu0 %v840
    %v968 = vpop.f32.mrb[0].mxu0
    %v969 = vadd.f32 %v664, %v968
    %v970 = vpop.f32.mrb[0].mxu0
    %v971 = vpop.f32.mrb[0].mxu0
    %v972 = vadd.f32 %v667, %v971
    %v973 = vpop.f32.mrb[0].mxu0
    %974 = vmatprep.mubr.bf16.mxu0 0
    %975 = vmatmul.mubr.bf16.gmra.mrb[0].mxu0 %v841
    %v976 = vpop.f32.mrb[0].mxu0
    %v977 = vadd.f32 %v672, %v976
    %v978 = vpop.f32.mrb[0].mxu0
    %v979 = vpop.f32.mrb[0].mxu0
    %v980 = vadd.f32 %v675, %v979
    %v981 = vpop.f32.mrb[0].mxu0
    %982 = vmatprep.mubr.bf16.mxu0 0
    %983 = vmatmul.mubr.bf16.gmra.mrb[0].mxu0 %v842
    %v984 = vpop.f32.mrb[0].mxu0
    %v985 = vadd.f32 %v680, %v984
    %v986 = vpop.f32.mrb[0].mxu0
    %v987 = vpop.f32.mrb[0].mxu0
    %v988 = vadd.f32 %v683, %v987
    %v989 = vpop.f32.mrb[0].mxu0
    %990 = vmatprep.mubr.bf16.mxu0 0
    %991 = vmatmul.mubr.bf16.gmra.mrb[0].mxu0 %v843
    %v992 = vpop.f32.mrb[0].mxu0
    %v993 = vadd.f32 %v688, %v992
    %v994 = vpop.f32.mrb[0].mxu0
    %v995 = vpop.f32.mrb[0].mxu0
    %v996 = vadd.f32 %v691, %v995
    %v997 = vpop.f32.mrb[0].mxu0
    %998 = vmatprep.mubr.bf16.mxu0 0
    %999 = vmatmul.mubr.bf16.gmra.mrb[0].mxu0 %v844
    %v1000 = vpop.f32.mrb[0].mxu0
    %v1001 = vadd.f32 %v696, %v1000
    %v1002 = vpop.f32.mrb[0].mxu0
    %v1003 = vpop.f32.mrb[0].mxu0
    %v1004 = vadd.f32 %v699, %v1003
    %v1005 = vpop.f32.mrb[0].mxu0
    %1006 = vmatprep.mubr.bf16.mxu0 0
    %1007 = vmatmul.mubr.bf16.gmra.mrb[0].mxu0 %v845
    %v1008 = vpop.f32.mrb[0].mxu0
    %v1009 = vadd.f32 %v704, %v1008
    %v1010 = vpop.f32.mrb[0].mxu0
    %v1011 = vpop.f32.mrb[0].mxu0
    %v1012 = vadd.f32 %v707, %v1011
    %v1013 = vpop.f32.mrb[0].mxu0
    %1014 = vmatprep.mubr.bf16.mxu0 0
    %1015 = vmatmul.mubr.bf16.gmra.mrb[0].mxu0 %v846
    %v1016 = vpop.f32.mrb[0].mxu0
    %v1017 = vadd.f32 %v712, %v1016
    %v1018 = vpop.f32.mrb[0].mxu0
    %v1019 = vpop.f32.mrb[0].mxu0
    %v1020 = vadd.f32 %v715, %v1019
    %v1021 = vpop.f32.mrb[0].mxu0
    %1022 = vmatprep.mubr.bf16.mxu0 0
    %1023 = vmatmul.mubr.bf16.gmra.mrb[0].mxu0 %v847
    %v1024 = vpop.f32.mrb[0].mxu0
    %v1025 = vadd.f32 %v720, %v1024
    %v1026 = vpop.f32.mrb[0].mxu0
    %v1027 = vpop.f32.mrb[0].mxu0
    %v1028 = vadd.f32 %v723, %v1027
    %v1029 = vpop.f32.mrb[0].mxu0
    %1030 = vmatprep.mubr.bf16.mxu0 0
    %1031 = vmatmul.mubr.bf16.gmra.mrb[0].mxu0 %v848
    %v1032 = vpop.f32.mrb[0].mxu0
    %v1033 = vadd.f32 %v728, %v1032
    %v1034 = vpop.f32.mrb[0].mxu0
    %v1035 = vpop.f32.mrb[0].mxu0
    %v1036 = vadd.f32 %v731, %v1035
    %v1037 = vpop.f32.mrb[0].mxu0
    %1038 = vmatprep.mubr.bf16.mxu0 0
    %1039 = vmatmul.mubr.bf16.gmra.mrb[0].mxu0 %v849
    %v1040 = vpop.f32.mrb[0].mxu0
    %v1041 = vadd.f32 %v736, %v1040
    %v1042 = vpop.f32.mrb[0].mxu0
    %v1043 = vpop.f32.mrb[0].mxu0
    %v1044 = vadd.f32 %v739, %v1043
    %v1045 = vpop.f32.mrb[0].mxu0
    %1046 = vmatprep.mubr.bf16.mxu0 0
    %1047 = vmatmul.mubr.bf16.gmra.mrb[0].mxu0 %v850
    %v1048 = vpop.f32.mrb[0].mxu0
    %v1049 = vadd.f32 %v744, %v1048
    %v1050 = vpop.f32.mrb[0].mxu0
    %v1051 = vpop.f32.mrb[0].mxu0
    %v1052 = vadd.f32 %v747, %v1051
    %v1053 = vpop.f32.mrb[0].mxu0
    %1054 = vmatprep.mubr.bf16.mxu0 0
    %1055 = vmatmul.mubr.bf16.gmra.mrb[0].mxu0 %v851
    %v1056 = vpop.f32.mrb[0].mxu0
    %v1057 = vadd.f32 %v752, %v1056
    %v1058 = vpop.f32.mrb[0].mxu0
    %v1059 = vpop.f32.mrb[0].mxu0
    %v1060 = vadd.f32 %v755, %v1059
    %v1061 = vpop.f32.mrb[0].mxu0
    %1062 = vmatprep.mubr.bf16.mxu0 0
    %1063 = vmatmul.mubr.bf16.gmra.mrb[0].mxu0 %v852
    %v1064 = vpop.f32.mrb[0].mxu0
    %v1065 = vadd.f32 %v760, %v1064
    %v1066 = vpop.f32.mrb[0].mxu0
    %v1067 = vpop.f32.mrb[0].mxu0
    %v1068 = vadd.f32 %v763, %v1067
    %v1069 = vpop.f32.mrb[0].mxu0
    %1070 = vmatprep.mubr.bf16.mxu0 0
    %1071 = vmatmul.mubr.bf16.gmra.mrb[0].mxu0 %v853
    %v1072 = vpop.f32.mrb[0].mxu0
    %v1073 = vadd.f32 %v768, %v1072
    %v1074 = vpop.f32.mrb[0].mxu0
    %v1075 = vpop.f32.mrb[0].mxu0
    %v1076 = vadd.f32 %v771, %v1075
    %v1077 = vpop.f32.mrb[0].mxu0
    %1078 = vdwg.mxu0
    %v1079 = vpack.c.bf16 %v956, %v953
    %v1080 = vpack.c.bf16 %v964, %v961
    %v1081 = vpack.c.bf16 %v972, %v969
    %v1082 = vpack.c.bf16 %v980, %v977
    %v1083 = vpack.c.bf16 %v988, %v985
    %v1084 = vpack.c.bf16 %v996, %v993
    %v1085 = vpack.c.bf16 %v1004, %v1001
    %v1086 = vpack.c.bf16 %v1012, %v1009
    %v1087 = vpack.c.bf16 %v1020, %v1017
    %v1088 = vpack.c.bf16 %v1028, %v1025
    %v1089 = vpack.c.bf16 %v1036, %v1033
    %v1090 = vpack.c.bf16 %v1044, %v1041
    %v1091 = vpack.c.bf16 %v1052, %v1049
    %v1092 = vpack.c.bf16 %v1060, %v1057
    %v1093 = vpack.c.bf16 %v1068, %v1065
    %v1094 = vpack.c.bf16 %v1076, %v1073
    %v1111 = vunpack.c.l.b16 %v1079
    %v1112 = vunpack.c.h.b16 %v1079
    %v1113 = vunpack.c.l.b16 %v1080
    %v1114 = vunpack.c.h.b16 %v1080
    %v1115 = vunpack.c.l.b16 %v1081
    %v1116 = vunpack.c.h.b16 %v1081
    %v1117 = vunpack.c.l.b16 %v1082
    %v1118 = vunpack.c.h.b16 %v1082
    %v1119 = vunpack.c.l.b16 %v1083
    %v1120 = vunpack.c.h.b16 %v1083
    %v1121 = vunpack.c.l.b16 %v1084
    %v1122 = vunpack.c.h.b16 %v1084
    %v1123 = vunpack.c.l.b16 %v1085
    %v1124 = vunpack.c.h.b16 %v1085
    %v1125 = vunpack.c.l.b16 %v1086
    %v1126 = vunpack.c.h.b16 %v1086
    %v1127 = vunpack.c.l.b16 %v1087
    %v1128 = vunpack.c.h.b16 %v1087
    %v1129 = vunpack.c.l.b16 %v1088
    %v1130 = vunpack.c.h.b16 %v1088
    %v1131 = vunpack.c.l.b16 %v1089
    %v1132 = vunpack.c.h.b16 %v1089
    %v1133 = vunpack.c.l.b16 %v1090
    %v1134 = vunpack.c.h.b16 %v1090
    %v1135 = vunpack.c.l.b16 %v1091
    %v1136 = vunpack.c.h.b16 %v1091
    %v1137 = vunpack.c.l.b16 %v1092
    %v1138 = vunpack.c.h.b16 %v1092
    %v1139 = vunpack.c.l.b16 %v1093
    %v1140 = vunpack.c.h.b16 %v1093
    %v1141 = vunpack.c.l.b16 %v1094
    %v1142 = vunpack.c.h.b16 %v1094
    %v1143 = vpack.c.b16 %v1111, %v1111
    %v1144 = vpack.c.b16 %v1112, %v1112
    %v1145 = vpack.c.b16 %v1113, %v1113
    %v1146 = vpack.c.b16 %v1114, %v1114
    %v1147 = vpack.c.b16 %v1115, %v1115
    %v1148 = vpack.c.b16 %v1116, %v1116
    %v1149 = vpack.c.b16 %v1117, %v1117
    %v1150 = vpack.c.b16 %v1118, %v1118
    %v1151 = vpack.c.b16 %v1119, %v1119
    %v1152 = vpack.c.b16 %v1120, %v1120
    %v1153 = vpack.c.b16 %v1121, %v1121
    %v1154 = vpack.c.b16 %v1122, %v1122
    %v1155 = vpack.c.b16 %v1123, %v1123
    %v1156 = vpack.c.b16 %v1124, %v1124
    %v1157 = vpack.c.b16 %v1125, %v1125
    %v1158 = vpack.c.b16 %v1126, %v1126
    %v1159 = vpack.c.b16 %v1127, %v1127
    %v1160 = vpack.c.b16 %v1128, %v1128
    %v1161 = vpack.c.b16 %v1129, %v1129
    %v1162 = vpack.c.b16 %v1130, %v1130
    %v1163 = vpack.c.b16 %v1131, %v1131
    %v1164 = vpack.c.b16 %v1132, %v1132
    %v1165 = vpack.c.b16 %v1133, %v1133
    %v1166 = vpack.c.b16 %v1134, %v1134
    %v1167 = vpack.c.b16 %v1135, %v1135
    %v1168 = vpack.c.b16 %v1136, %v1136
    %v1169 = vpack.c.b16 %v1137, %v1137
    %v1170 = vpack.c.b16 %v1138, %v1138
    %v1171 = vpack.c.b16 %v1139, %v1139
    %v1172 = vpack.c.b16 %v1140, %v1140
    %v1173 = vpack.c.b16 %v1141, %v1141
    %v1174 = vpack.c.b16 %v1142, %v1142
    %1207 = vst [vmem:[#allocation11] sm:$0xf] %v1143
    %1208 = vst [vmem:[#allocation11 + $0x4] sm:$0xf] %v1144
    %1209 = vst [vmem:[#allocation11 + $0x8] sm:$0xf] %v1145
    %1210 = vst [vmem:[#allocation11 + $0xc] sm:$0xf] %v1146
    %1211 = vst [vmem:[#allocation11 + $0x10] sm:$0xf] %v1147
    %1212 = vst [vmem:[#allocation11 + $0x14] sm:$0xf] %v1148
    %1213 = vst [vmem:[#allocation11 + $0x18] sm:$0xf] %v1149
    %1214 = vst [vmem:[#allocation11 + $0x1c] sm:$0xf] %v1150
    %1215 = vst [vmem:[#allocation11 + $0x20] sm:$0xf] %v1151
    %1216 = vst [vmem:[#allocation11 + $0x24] sm:$0xf] %v1152
    %1217 = vst [vmem:[#allocation11 + $0x28] sm:$0xf] %v1153
    %1218 = vst [vmem:[#allocation11 + $0x2c] sm:$0xf] %v1154
    %1219 = vst [vmem:[#allocation11 + $0x30] sm:$0xf] %v1155
    %1220 = vst [vmem:[#allocation11 + $0x34] sm:$0xf] %v1156
    %1221 = vst [vmem:[#allocation11 + $0x38] sm:$0xf] %v1157
    %1222 = vst [vmem:[#allocation11 + $0x3c] sm:$0xf] %v1158
    %1223 = vst [vmem:[#allocation11 + $0x40] sm:$0xf] %v1159
    %1224 = vst [vmem:[#allocation11 + $0x44] sm:$0xf] %v1160
    %1225 = vst [vmem:[#allocation11 + $0x48] sm:$0xf] %v1161
    %1226 = vst [vmem:[#allocation11 + $0x4c] sm:$0xf] %v1162
    %1227 = vst [vmem:[#allocation11 + $0x50] sm:$0xf] %v1163
    %1228 = vst [vmem:[#allocation11 + $0x54] sm:$0xf] %v1164
    %1229 = vst [vmem:[#allocation11 + $0x58] sm:$0xf] %v1165
    %1230 = vst [vmem:[#allocation11 + $0x5c] sm:$0xf] %v1166
    %1231 = vst [vmem:[#allocation11 + $0x60] sm:$0xf] %v1167
    %1232 = vst [vmem:[#allocation11 + $0x64] sm:$0xf] %v1168
    %1233 = vst [vmem:[#allocation11 + $0x68] sm:$0xf] %v1169
    %1234 = vst [vmem:[#allocation11 + $0x6c] sm:$0xf] %v1170
    %1235 = vst [vmem:[#allocation11 + $0x70] sm:$0xf] %v1171
    %1236 = vst [vmem:[#allocation11 + $0x74] sm:$0xf] %v1172
    %1237 = vst [vmem:[#allocation11 + $0x78] sm:$0xf] %v1173
    %1238 = vst [vmem:[#allocation11 + $0x7c] sm:$0xf] %v1174
    // Predicated region
    $region46: #{tpu_custom_call.1} parent=1 // pred_check
      _
    $region47: #{tpu_custom_call.1} parent=1 // pred_check_branch
      %1240 = sbr.rel (0) target = $region49
    $region48: #{tpu_custom_call.1} parent=1 // pred_region
      %s1242 = ssub.s32 2048, 2048
      %1243 = vsyncadd [#allocation4], %s1242
      %s1244 = sshll.u32 [#allocation11], 4
      %s1245 = int_to_ptr.vmem [resolvable:$true] %s1244
      %1250 = dma.vmem_to_hbm [thread:$0]  %s1245, 2048, %s6, [#allocation4], 64, 64, 4
    $region49: #{tpu_custom_call.1} parent=1 // pred_fallthru
      _
    // Predicated region
    $region50: #{tpu_custom_call.1} parent=1 // pred_check
      _
    $region51: #{tpu_custom_call.1} parent=1 // pred_check_branch
      %1252 = sbr.rel (0) target = $region53
    $region52: #{tpu_custom_call.1} parent=1 // pred_region
      %1253 = dma.done [#allocation4], 2048
    $region53: #{tpu_custom_call.1} parent=1 // pred_fallthru
      _
    %1254 = vsyncpa [#allocation3], 1
    %1255 = vsyncpa [#allocation6], 1
    %1256 = vsyncpa [#allocation9], 1
    %1257 = vsyncpa [#allocation4], 1

</llo_original>
